<compile_context>
chip_gen: v7x
topology: tpu7x:2x2x1
jax: 0.10.0
libtpu: 0.0.40
codegen_flags: <defaults>
</compile_context>

<pallas_src>
import functools

import jax
import jax.numpy as jnp
from jax import lax
from jax.experimental import pallas as pl
from jax.experimental.pallas import tpu as pltpu

_EPSILON = 1e-06

_LANE = 128
_SUBLANE = 8
_MAX_TM = 64                            # 3 f32 (64,128) accumulators = 24 vregs
_MAX_STATIC_UNROLL = 16                 # fully unroll short sub-slab loops
_FORI_UNROLL = 8                        # partial unroll for long sub-slab loops
_BLOCK_BUDGET_BYTES = 8 * 1024 * 1024   # both input blocks, single buffer
_VMEM_LIMIT_BYTES = 32 * 1024 * 1024    # safe scoped limit on v5e/v6e/v7x


def _round_up(x: int, m: int) -> int:
    return ((x + m - 1) // m) * m


def _iou_partial_kernel(yp_ref, yt_ref, out_ref, *, hw, tk, kpc, need_mask):
    """Accumulate lane-partial sums of yt*yp, yp^2, yt^2 into a (3, tm, 128) block."""
    c = pl.program_id(0)     # megacore split of the k range (size 1 or 2)
    k = pl.program_id(2)     # reduction axis (innermost, "arbitrary")

    @pl.when(k == 0)
    def _init():
        out_ref[...] = jnp.zeros_like(out_ref)

    tm = yp_ref.shape[0]
    n_sub = tk // _LANE
    base = (c * kpc + k) * tk            # true global column offset of this block

    if need_mask:
        lane = lax.broadcasted_iota(jnp.int32, (tm, _LANE), 1)

    def accumulate(off, carry):
        inter, p2, t2 = carry
        yp = yp_ref[:, pl.ds(off, _LANE)].astype(jnp.float32)
        yt = yt_ref[:, pl.ds(off, _LANE)].astype(jnp.float32)
        if need_mask:
            valid = (base + off + lane) < hw
            yp = jnp.where(valid, yp, 0.0)
            yt = jnp.where(valid, yt, 0.0)
        return (inter + yt * yp, p2 + yp * yp, t2 + yt * yt)

    zero = jnp.zeros((tm, _LANE), jnp.float32)
    carry = (zero, zero, zero)
    if n_sub <= _MAX_STATIC_UNROLL:
        # Short static loop: fully unrolled, lane-boundary slices (no relayout).
        for j in range(n_sub):
            carry = accumulate(j * _LANE, carry)
    else:
        carry = lax.fori_loop(
            0, n_sub,
            lambda j, cr: accumulate(pl.multiple_of(j * _LANE, _LANE), cr),
            carry,
            unroll=_FORI_UNROLL)

    inter, p2, t2 = carry
    # Single VMEM read-modify-write per grid step (accumulators stayed in vregs).
    out_ref[0, :, :] += inter
    out_ref[1, :, :] += p2
    out_ref[2, :, :] += t2


@jax.jit
def iou_loss(y_pred: jax.Array, y_true: jax.Array) -> jax.Array:
    """IoU loss; reduction over the last two dims (NCHW -> per-(n,c) IoU)."""
    assert y_pred.shape == y_true.shape
    assert y_pred.ndim >= 2

    hw = y_pred.shape[-2] * y_pred.shape[-1]
    rows = 1
    for d in y_pred.shape[:-2]:
        rows *= d
    rows = max(rows, 1)

    yp2d = y_pred.reshape(rows, hw)
    yt2d = y_true.reshape(rows, hw)

    itemsize = jnp.dtype(y_pred.dtype).itemsize

    # Row tile: <= 64 (vreg-resident accumulators), multiple of 8 sublanes,
    # or the full (short) row dim when rows < 8.
    if rows >= _MAX_TM:
        tm = _MAX_TM
    elif rows >= _SUBLANE:
        tm = _round_up(rows, _SUBLANE)
    else:
        tm = rows
    row_blocks = pl.cdiv(rows, tm)

    # Lane tile: multiple of 128, both input blocks fit the ~8 MiB budget.
    tk = _BLOCK_BUDGET_BYTES // (2 * itemsize * tm)
    tk = max(_LANE, (tk // _LANE) * _LANE)
    tk = min(tk, _round_up(hw, _LANE))
    k_blocks = pl.cdiv(hw, tk)

    # v7x megacore: if there is only one row block, split the k range across a
    # leading size-2 "parallel" axis so both TensorCores get work.
    n_split = 2 if (row_blocks == 1 and k_blocks >= 2) else 1
    kpc = pl.cdiv(k_blocks, n_split)

    # In-kernel masking is only required when the last k block is ragged or the
    # per-core split over-covers the k range (clamped index map re-reads a block).
    need_mask = (hw % tk != 0) or (n_split * kpc != k_blocks)

    rows_out = row_blocks * tm

    kernel = functools.partial(
        _iou_partial_kernel, hw=hw, tk=tk, kpc=kpc, need_mask=need_mask)

    def in_map(c, i, k):
        # Clamp so a split core never asks for a block past the array end; the
        # duplicate block it fetches is fully masked off in the kernel.
        return (i, jnp.minimum(c * kpc + k, k_blocks - 1))

    if kpc >= 3:
        in_spec = pl.BlockSpec((tm, tk), in_map, pipeline_mode=pl.Buffered(3))
    else:
        in_spec = pl.BlockSpec((tm, tk), in_map)

    cost = pl.CostEstimate(
        flops=6 * rows * hw,
        transcendentals=0,
        bytes_accessed=2 * rows * hw * itemsize + n_split * 3 * rows_out * _LANE * 4,
    )

    partial = pl.pallas_call(
        kernel,
        out_shape=jax.ShapeDtypeStruct((n_split * 3, rows_out, _LANE), jnp.float32),
        grid_spec=pltpu.PrefetchScalarGridSpec(
            num_scalar_prefetch=0,
            grid=(n_split, row_blocks, kpc),
            in_specs=[in_spec, in_spec],
            out_specs=pl.BlockSpec((3, tm, _LANE), lambda c, i, k: (c, i, 0)),
        ),
        compiler_params=pltpu.CompilerParams(
            dimension_semantics=("parallel", "parallel", "arbitrary"),
            vmem_limit_bytes=_VMEM_LIMIT_BYTES,
        ),
        cost_estimate=cost,
    )(yp2d, yt2d)

    # Tiny finalize in plain jnp: combine core-splits and lanes, drop padded rows.
    sums = jnp.sum(partial.reshape(n_split, 3, rows_out, _LANE), axis=(0, 3))
    sums = sums[:, :rows]                      # (3, rows)
    inter, p2, t2 = sums[0], sums[1], sums[2]
    union = t2 + p2 - inter
    iou = (inter + _EPSILON) / (union + _EPSILON)
    return 1.0 - jnp.mean(iou)


def _iou_loss_ref(y_pred, y_true):
    inter = (y_true * y_pred).sum(-1).sum(-1)
    union = (y_true ** 2).sum(-1).sum(-1) + (y_pred ** 2).sum(-1).sum(-1) - inter
    iou = (inter + _EPSILON) / (union + _EPSILON)
    return 1.0 - jnp.mean(iou)


if __name__ == "__main__":
    key = jax.random.PRNGKey(0)
    k1, k2 = jax.random.split(key)
    # Small NCHW shapes consistent with a segmentation head output.
    N, C, H, W = 2, 4, 16, 16
    y_pred = jax.nn.sigmoid(jax.random.normal(k1, (N, C, H, W), jnp.float32))
    y_true = (jax.random.uniform(k2, (N, C, H, W)) > 0.5).astype(jnp.float32)

    out = iou_loss(y_pred, y_true)
    out = jax.block_until_ready(out)

    ref = _iou_loss_ref(y_pred, y_true)
    assert jnp.allclose(out, ref, atol=1e-5, rtol=1e-5), (out, ref)

    print("KERNEL_OK")
</pallas_src>

<mosaic_0001>
module attributes {stable_mosaic.version = 11 : i64} {
  func.func @_iou_partial_kernel(%arg0: i32, %arg1: i32, %arg2: i32, %arg3: memref<8x256xf32, #tpu.memory_space<vmem>>, %arg4: memref<8x256xf32, #tpu.memory_space<vmem>>, %arg5: memref<3x8x128xf32, #tpu.memory_space<vmem>>) attributes {dimension_semantics = [#tpu.dimension_semantics<parallel>, #tpu.dimension_semantics<parallel>, #tpu.dimension_semantics<arbitrary>], iteration_bounds = array<i64: 1, 1, 1>, scalar_prefetch = 0 : i64, scratch_operands = 0 : i64, tpu.core_type = #tpu.core_type<tc>, window_params = [{transform_indices = @transform_0, window_bounds = array<i64: 8, 256>}, {transform_indices = @transform_1, window_bounds = array<i64: 8, 256>}, {transform_indices = @transform_2, window_bounds = array<i64: 3, 8, 128>}]} {
    %c0_i32 = arith.constant 0 : i32
    %0 = arith.cmpi eq, %arg2, %c0_i32 : i32
    %1 = arith.extui %0 : i1 to i32
    %c0_i32_0 = arith.constant 0 : i32
    %2 = arith.cmpi ne, %1, %c0_i32_0 : i32
    scf.if %2 {
      %cst_23 = arith.constant 0.000000e+00 : f32
      %38 = vector.broadcast %cst_23 : f32 to vector<3x8x128xf32>
      %c0_24 = arith.constant 0 : index
      %c0_25 = arith.constant 0 : index
      %c0_26 = arith.constant 0 : index
      %39 = vector.load %arg5[%c0_24, %c0_25, %c0_26] : memref<3x8x128xf32, #tpu.memory_space<vmem>>, vector<3x8x128xf32>
      tpu.vector_store %arg5[%c0_24, %c0_25, %c0_26], %38 {strides = array<i32>} : memref<3x8x128xf32, #tpu.memory_space<vmem>>, vector<3x8x128xf32>,
    } else {
    }
    %cst = arith.constant 0.000000e+00 : f32
    %3 = vector.broadcast %cst : f32 to vector<8x128xf32>
    %c0 = arith.constant 0 : index
    %c0_1 = arith.constant 0 : index
    %4 = vector.load %arg3[%c0, %c0_1] : memref<8x256xf32, #tpu.memory_space<vmem>>, vector<8x128xf32>
    %c0_2 = arith.constant 0 : index
    %c0_3 = arith.constant 0 : index
    %5 = vector.load %arg4[%c0_2, %c0_3] : memref<8x256xf32, #tpu.memory_space<vmem>>, vector<8x128xf32>
    %6 = arith.mulf %5, %4 : vector<8x128xf32>
    %7 = arith.addf %3, %6 : vector<8x128xf32>
    %8 = arith.mulf %4, %4 : vector<8x128xf32>
    %9 = arith.addf %3, %8 : vector<8x128xf32>
    %10 = arith.mulf %5, %5 : vector<8x128xf32>
    %11 = arith.addf %3, %10 : vector<8x128xf32>
    %c0_4 = arith.constant 0 : index
    %c128 = arith.constant 128 : index
    %12 = vector.load %arg3[%c0_4, %c128] : memref<8x256xf32, #tpu.memory_space<vmem>>, vector<8x128xf32>
    %c0_5 = arith.constant 0 : index
    %c128_6 = arith.constant 128 : index
    %13 = vector.load %arg4[%c0_5, %c128_6] : memref<8x256xf32, #tpu.memory_space<vmem>>, vector<8x128xf32>
    %14 = arith.mulf %13, %12 : vector<8x128xf32>
    %15 = arith.addf %7, %14 : vector<8x128xf32>
    %16 = arith.mulf %12, %12 : vector<8x128xf32>
    %17 = arith.addf %9, %16 : vector<8x128xf32>
    %18 = arith.mulf %13, %13 : vector<8x128xf32>
    %19 = arith.addf %11, %18 : vector<8x128xf32>
    %c0_7 = arith.constant 0 : index
    %c0_8 = arith.constant 0 : index
    %c0_9 = arith.constant 0 : index
    %20 = vector.load %arg5[%c0_7, %c0_8, %c0_9] : memref<3x8x128xf32, #tpu.memory_space<vmem>>, vector<1x8x128xf32>
    %21 = vector.shape_cast %20 : vector<1x8x128xf32> to vector<8x128xf32>
    %22 = arith.addf %21, %15 : vector<8x128xf32>
    %c0_10 = arith.constant 0 : index
    %c0_11 = arith.constant 0 : index
    %c0_12 = arith.constant 0 : index
    %23 = vector.load %arg5[%c0_10, %c0_11, %c0_12] : memref<3x8x128xf32, #tpu.memory_space<vmem>>, vector<1x8x128xf32>
    %24 = vector.shape_cast %23 : vector<1x8x128xf32> to vector<8x128xf32>
    %25 = vector.shape_cast %22 : vector<8x128xf32> to vector<1x8x128xf32>
    tpu.vector_store %arg5[%c0_10, %c0_11, %c0_12], %25 {strides = array<i32>} : memref<3x8x128xf32, #tpu.memory_space<vmem>>, vector<1x8x128xf32>,
    %c1 = arith.constant 1 : index
    %c0_13 = arith.constant 0 : index
    %c0_14 = arith.constant 0 : index
    %26 = vector.load %arg5[%c1, %c0_13, %c0_14] : memref<3x8x128xf32, #tpu.memory_space<vmem>>, vector<1x8x128xf32>
    %27 = vector.shape_cast %26 : vector<1x8x128xf32> to vector<8x128xf32>
    %28 = arith.addf %27, %17 : vector<8x128xf32>
    %c1_15 = arith.constant 1 : index
    %c0_16 = arith.constant 0 : index
    %c0_17 = arith.constant 0 : index
    %29 = vector.load %arg5[%c1_15, %c0_16, %c0_17] : memref<3x8x128xf32, #tpu.memory_space<vmem>>, vector<1x8x128xf32>
    %30 = vector.shape_cast %29 : vector<1x8x128xf32> to vector<8x128xf32>
    %31 = vector.shape_cast %28 : vector<8x128xf32> to vector<1x8x128xf32>
    tpu.vector_store %arg5[%c1_15, %c0_16, %c0_17], %31 {strides = array<i32>} : memref<3x8x128xf32, #tpu.memory_space<vmem>>, vector<1x8x128xf32>,
    %c2 = arith.constant 2 : index
    %c0_18 = arith.constant 0 : index
    %c0_19 = arith.constant 0 : index
    %32 = vector.load %arg5[%c2, %c0_18, %c0_19] : memref<3x8x128xf32, #tpu.memory_space<vmem>>, vector<1x8x128xf32>
    %33 = vector.shape_cast %32 : vector<1x8x128xf32> to vector<8x128xf32>
    %34 = arith.addf %33, %19 : vector<8x128xf32>
    %c2_20 = arith.constant 2 : index
    %c0_21 = arith.constant 0 : index
    %c0_22 = arith.constant 0 : index
    %35 = vector.load %arg5[%c2_20, %c0_21, %c0_22] : memref<3x8x128xf32, #tpu.memory_space<vmem>>, vector<1x8x128xf32>
    %36 = vector.shape_cast %35 : vector<1x8x128xf32> to vector<8x128xf32>
    %37 = vector.shape_cast %34 : vector<8x128xf32> to vector<1x8x128xf32>
    tpu.vector_store %arg5[%c2_20, %c0_21, %c0_22], %37 {strides = array<i32>} : memref<3x8x128xf32, #tpu.memory_space<vmem>>, vector<1x8x128xf32>,
    return
  }
  func.func @transform_0(%arg0: i32, %arg1: i32, %arg2: i32) -> (i32, i32) {
    %c1_i32 = arith.constant 1 : i32
    %0 = arith.muli %arg0, %c1_i32 : i32
    %1 = arith.addi %0, %arg2 : i32
    %c0_i32 = arith.constant 0 : i32
    %2 = arith.minsi %1, %c0_i32 : i32
    %c0_i32_0 = arith.constant 0 : i32
    return %arg1, %2 : i32, i32
  }
  func.func @transform_1(%arg0: i32, %arg1: i32, %arg2: i32) -> (i32, i32) {
    %c1_i32 = arith.constant 1 : i32
    %0 = arith.muli %arg0, %c1_i32 : i32
    %1 = arith.addi %0, %arg2 : i32
    %c0_i32 = arith.constant 0 : i32
    %2 = arith.minsi %1, %c0_i32 : i32
    %c0_i32_0 = arith.constant 0 : i32
    return %arg1, %2 : i32, i32
  }
  func.func @transform_2(%arg0: i32, %arg1: i32, %arg2: i32) -> (i32, i32, i32) {
    %c0_i32 = arith.constant 0 : i32
    %c0_i32_0 = arith.constant 0 : i32
    return %arg0, %arg1, %c0_i32 : i32, i32, i32
  }
}

</mosaic_0001>

<llo_original>
// kernel: iou_loss.1
$region0: #{iou_loss.1}
  #allocation0 [shape = 'u32[]', space=smem, size = 0x4, offset = 0x4, fixed_abs, tag = 'smem constant byte address 0x4 - core index']
  #allocation1 [shape = 'u32[144,128]{1,0:T(1,128)}', space=vmem, size = 0x12000, scoped, tag = 'internal scratch']
  %s0 = inlined_call_operand.vmem [shape: f32[8,256], index: 0, kind: input, shape index: {}]
  %s1 = inlined_call_operand.vmem [shape: f32[8,256], index: 1, kind: input, shape index: {}]
  %s2 = inlined_call_operand.vmem [shape: f32[3,8,128], index: 2, kind: output, shape index: {}]
  %s3 = sld [smem:[#allocation0]]
  $region22: #{iou_loss.1} parent=0
    _
  %s5 = ssub.s32 1, %s3
  %s6 = scalar_select 0, %s5, %s3
  // Predicated region
  $region2: #{iou_loss.1} parent=0 // pred_check
    _
  $region3: #{iou_loss.1} parent=0 // pred_check_branch
    %8 = sbr.rel (0) target = $region5
  $region4: #{iou_loss.1} parent=0 // pred_region
    %s9 = sadd.s32 0, 0
    %p10 = scmp.lt.s32.totalorder %s9, 0
    %s11 = scalar_select %p10, %s9, 0
    %s12 = smul.u32 2, %s11
    %p13 = scmp.lt.s32.totalorder %s12, 1
    %s14 = scalar_select %p13, %s12, 1
    %s15 = smul.addr %s14, 8
    %s16 = scalar_lea.vmem %s0, %s15
    %s17 = sadd.s32 0, 0
    %p18 = scmp.lt.s32.totalorder %s17, 0
    %s19 = scalar_select %p18, %s17, 0
    %s20 = smul.u32 2, %s19
  $region5: #{iou_loss.1} parent=0 // pred_fallthru
    _
  // Predicated region
  $region6: #{iou_loss.1} parent=0 // pred_check
    _
  $region7: #{iou_loss.1} parent=0 // pred_check_branch
    %22 = sbr.rel (0) target = $region9
  $region8: #{iou_loss.1} parent=0 // pred_region
    %s23 = sadd.s32 0, 0
    %p24 = scmp.lt.s32.totalorder %s23, 0
    %s25 = scalar_select %p24, %s23, 0
    %s26 = smul.u32 2, %s25
    %p27 = scmp.lt.s32.totalorder %s26, 1
    %s28 = scalar_select %p27, %s26, 1
    %s29 = smul.addr %s28, 8
    %s30 = scalar_lea.vmem %s1, %s29
    %s31 = sadd.s32 0, 0
    %p32 = scmp.lt.s32.totalorder %s31, 0
    %s33 = scalar_select %p32, %s31, 0
    %s34 = smul.u32 2, %s33
  $region9: #{iou_loss.1} parent=0 // pred_fallthru
    _
  %s35 = sadd.s32 0, 0
  %p36 = scmp.lt.s32.totalorder %s35, 0
  %s37 = scalar_select %p36, %s35, 0
  %s38 = smul.u32 2, %s37
  %p39 = scmp.lt.s32.totalorder %s38, 1
  %s40 = scalar_select %p39, %s38, 1
  %s41 = smul.addr %s40, 8
  %s42 = scalar_lea.vmem %s0, %s41
  %s43 = sadd.s32 0, 0
  %p44 = scmp.lt.s32.totalorder %s43, 0
  %s45 = scalar_select %p44, %s43, 0
  %s46 = smul.u32 2, %s45
  %p47 = scmp.lt.s32.totalorder %s46, 1
  %s48 = scalar_select %p47, %s46, 1
  %s49 = smul.addr %s48, 8
  %s50 = scalar_lea.vmem %s1, %s49
  %s51 = sadd.s32 0, 0
  %p52 = scmp.lt.s32.totalorder %s51, 0
  %s53 = scalar_select %p52, %s51, 0
  %s54 = smul.u32 2, %s53
  %p55 = scmp.lt.s32.totalorder %s54, 1
  %s56 = scalar_select %p55, %s54, 1
  %s57 = smul.addr %s56, 8
  %s58 = scalar_lea.vmem %s0, %s57
  %s59 = sadd.s32 0, 0
  %p60 = scmp.lt.s32.totalorder %s59, 0
  %s61 = scalar_select %p60, %s59, 0
  %s62 = smul.u32 2, %s61
  %s63 = sadd.s32 0, 0
  %p64 = scmp.lt.s32.totalorder %s63, 0
  %s65 = scalar_select %p64, %s63, 0
  %s66 = smul.u32 2, %s65
  %p67 = scmp.lt.s32.totalorder %s66, 1
  %s68 = scalar_select %p67, %s66, 1
  %s69 = smul.addr %s68, 8
  %s70 = scalar_lea.vmem %s1, %s69
  %s71 = sadd.s32 0, 0
  %p72 = scmp.lt.s32.totalorder %s71, 0
  %s73 = scalar_select %p72, %s71, 0
  %s74 = smul.u32 2, %s73
  %p75 = scmp.eq.s32.totalorder 0, 0
  // Predicated region
  $region10: #{iou_loss.1} parent=0 // pred_check
    %p76 = pneg %p75
  $region11: #{iou_loss.1} parent=0 // pred_check_branch
    %78 = sbr.rel (%p76) target = $region13
  $region12: #{iou_loss.1} parent=0 // pred_region
    %79 = vst [vmem:[%s2] sm:$0xff] 0.0
    %80 = vst [vmem:[%s2 + $0x8] sm:$0xff] 0.0
    %81 = vst [vmem:[%s2 + $0x10] sm:$0xff] 0.0
  $region13: #{iou_loss.1} parent=0 // pred_fallthru
    _
  %v82 = vld [vmem:[%s58] sm:$0xff]
  %v83 = vld [vmem:[%s70] sm:$0xff]
  %v84 = vmul.f32 %v83, %v82
  %v85 = vadd.f32 %v84, 0.0
  %v86 = vmul.f32 %v82, %v82
  %v87 = vadd.f32 %v86, 0.0
  %v88 = vmul.f32 %v83, %v83
  %v89 = vadd.f32 %v88, 0.0
  %v90 = vld [vmem:[%s58 + $0x8] sm:$0xff]
  %v91 = vld [vmem:[%s70 + $0x8] sm:$0xff]
  %v92 = vmul.f32 %v91, %v90
  %v93 = vadd.f32 %v85, %v92
  %v94 = vmul.f32 %v90, %v90
  %v95 = vadd.f32 %v87, %v94
  %v96 = vmul.f32 %v91, %v91
  %v97 = vadd.f32 %v89, %v96
  %v98 = vld [vmem:[%s2] sm:$0xff]
  %v99 = vadd.f32 %v98, %v93
  %100 = vst [vmem:[%s2] sm:$0xff] %v99
  %s101 = scalar_lea.vmem %s2, 8
  %v102 = vld [vmem:[%s101] sm:$0xff]
  %v103 = vadd.f32 %v102, %v95
  %104 = vst [vmem:[%s101] sm:$0xff] %v103
  %s105 = scalar_lea.vmem %s2, 16
  %v106 = vld [vmem:[%s105] sm:$0xff]
  %v107 = vadd.f32 %v106, %v97
  %108 = vst [vmem:[%s105] sm:$0xff] %v107
  // Predicated region
  $region14: #{iou_loss.1} parent=0 // pred_check
    _
  $region15: #{iou_loss.1} parent=0 // pred_check_branch
    %110 = sbr.rel (0) target = $region17
  $region16: #{iou_loss.1} parent=0 // pred_region
    _
  $region17: #{iou_loss.1} parent=0 // pred_fallthru
    _
  // Predicated region
  $region18: #{iou_loss.1} parent=0 // pred_check
    _
  $region19: #{iou_loss.1} parent=0 // pred_check_branch
    %112 = sbr.rel (0) target = $region21
  $region20: #{iou_loss.1} parent=0 // pred_region
    _
  $region21: #{iou_loss.1} parent=0 // pred_fallthru
    _

</llo_original>
